<compile_context>
chip_gen: v7x
topology: tpu7x:2x2x1
jax: 0.10.0
libtpu: 0.0.40
codegen_flags: <defaults>
</compile_context>

<pallas_src>
import math
import functools

import jax
import jax.numpy as jnp
from jax.experimental import pallas as pl
from jax.experimental.pallas import tpu as pltpu


def _round_up(x, m):
    return ((x + m - 1) // m) * m


def _vmem_capacity_bytes():
    # v5e/v6e: 128 MiB per TensorCore, v7x: 64 MiB.  Fall back to the smallest.
    try:
        return int(pltpu.get_tpu_info().vmem_capacity_bytes)
    except Exception:
        return 64 << 20


def _choose_block_n(n_classes, d_pad, batch, vmem_cap):
    """Largest lane-dense class tile that fits the pipeline VMEM budget."""
    budget = int(0.55 * vmem_cap)                  # headroom for compiler temporaries
    resident = batch * d_pad * 2                   # x_n (bf16), resident across tiles
    per_col = 2 * d_pad * 2 + 2 * batch * 4        # dbl-buf bf16 weight + dbl-buf f32 out
    bn = (budget - resident) // per_col
    bn = max(128, min(bn, 8192))                   # multi-MiB tiles amortize grid-step cost
    bn = (bn // 128) * 128                         # lane-dense output / 8-aligned weight rows
    # Keep >=2 (ideally >=4) grid steps so the "parallel" axis can shard across
    # v7x's two TensorCores; never shrink tiles below 512 (or 128) columns.
    if n_classes >= 4 * 512:
        bn = min(bn, max(512, _round_up(pl.cdiv(n_classes, 4), 128)))
    elif n_classes > 128:
        bn = min(bn, max(128, _round_up(pl.cdiv(n_classes, 2), 128)))
    else:
        bn = 128
    return bn


def arcface_kernel(xn_ref, wn_ref, label_ref, out_ref, *,
                   s, cos_m, sin_m, th, mm, ls_eps, easy_margin,
                   out_features, block_n):
    j = pl.program_id(0)

    x_n = xn_ref[...]          # (B, D_pad)  bf16, pre-normalized in the wrapper
    w_n = wn_ref[...]          # (TN, D_pad) bf16, pre-normalized & cached across calls

    # cosine = x_n @ w_n^T without materializing the transpose (contract last dims).
    cosine = jax.lax.dot_general(
        x_n, w_n, (((1,), (1,)), ((), ())),
        preferred_element_type=jnp.float32)        # (B, TN) f32

    # Clamp: rounding can push |cosine| slightly above 1 -> would give NaN.
    sine = jnp.sqrt(jnp.maximum(1.0 - cosine * cosine, 0.0))
    phi = cosine * cos_m - sine * sin_m
    if easy_margin:
        phi = jnp.where(cosine > 0.0, phi, cosine)
    else:
        phi = jnp.where(cosine > th, phi, cosine - mm)

    # scatter_(1, label, 1) equivalent via global-column-index compare; no float
    # one_hot materialized (trimmed VPU epilogue).
    label = label_ref[...]                                            # (B, 1) int32
    col = jax.lax.broadcasted_iota(jnp.int32, cosine.shape, 1) + j * block_n
    is_target = col == label
    if ls_eps > 0.0:
        coeff = jnp.where(is_target,
                          (1.0 - ls_eps) + ls_eps / out_features,     # global N, not TN
                          ls_eps / out_features)
        out = (cosine + coeff * (phi - cosine)) * s
    else:
        out = jnp.where(is_target, phi, cosine) * s
    out_ref[...] = out.astype(out_ref.dtype)


def prepare_arcface_weight(weight, *, block_n=None, batch_hint=8):
    """One-time weight prep -- cache the result across forward calls.

    Normalizes the f32 weight rows, casts to bf16, zero-pads in_features to a
    multiple of 128 and out_features to a multiple of the chosen class tile.
    Returns (w_n_bf16_padded, block_n, d_pad, out_features).
    """
    n, d = weight.shape
    d_pad = _round_up(d, 128)
    vmem_cap = _vmem_capacity_bytes()
    if block_n is None:
        block_n = _choose_block_n(n, d_pad, batch_hint, vmem_cap)
    assert block_n % 128 == 0
    n_pad = _round_up(n, block_n)

    wf = weight.astype(jnp.float32)
    w_n = wf * jax.lax.rsqrt(
        jnp.maximum(jnp.sum(wf * wf, axis=1, keepdims=True), 1e-24))  # 1/max(||w||,1e-12)
    w_n = jnp.pad(w_n, ((0, n_pad - n), (0, d_pad - d))).astype(jnp.bfloat16)
    return w_n, block_n, d_pad, n


def arcface_forward(x, prepared, label, *, s=30.0, m=0.3,
                    easy_margin=False, ls_eps=0.0):
    w_n, block_n, d_pad, out_features = prepared
    b, d = x.shape
    n_pad, d_pad_w = w_n.shape
    assert d_pad_w == d_pad and d <= d_pad and n_pad % block_n == 0
    num_tiles = n_pad // block_n

    # Tile-invariant F.normalize(input) hoisted out of the grid loop; zero-pad D
    # to the lane multiple (zero columns don't change the cosine).
    xf = x.astype(jnp.float32)
    x_n = xf / jnp.maximum(jnp.linalg.norm(xf, axis=1, keepdims=True), 1e-12)
    x_n = jnp.pad(x_n, ((0, 0), (0, d_pad - d))).astype(jnp.bfloat16)

    label2d = label.astype(jnp.int32).reshape(b, 1)

    kernel = functools.partial(
        arcface_kernel,
        s=float(s),
        cos_m=math.cos(m),
        sin_m=math.sin(m),
        th=math.cos(math.pi - m),
        mm=math.sin(math.pi - m) * m,
        ls_eps=float(ls_eps),
        easy_margin=easy_margin,
        out_features=out_features,
        block_n=block_n,
    )

    # VMEM budget sized from the actual tiles, capped below the per-generation
    # physical capacity (v7x: 64 MiB/TC).
    vmem_cap = _vmem_capacity_bytes()
    pipeline_bytes = (2 * block_n * d_pad * 2     # weight tiles (bf16, double-buffered)
                      + 2 * b * block_n * 4       # output tiles (f32, double-buffered)
                      + b * d_pad * 2             # resident x_n
                      + 8 * 128 * 4)              # label tile padding
    vmem_limit = int(min(0.9 * vmem_cap, max(16 << 20, 2 * pipeline_bytes)))

    out = pl.pallas_call(
        kernel,
        out_shape=jax.ShapeDtypeStruct((b, n_pad), jnp.float32),
        grid=(num_tiles,),
        in_specs=[
            pl.BlockSpec((b, d_pad), lambda j: (0, 0)),        # x_n: resident across tiles
            pl.BlockSpec((block_n, d_pad), lambda j: (j, 0)),  # normalized weight: streamed
            pl.BlockSpec((b, 1), lambda j: (0, 0)),            # label: resident
        ],
        out_specs=pl.BlockSpec((b, block_n), lambda j: (0, j)),
        compiler_params=pltpu.CompilerParams(
            dimension_semantics=("parallel",),                 # megacore sharding on v7x
            vmem_limit_bytes=vmem_limit),
    )(x_n, w_n, label2d)

    return out if n_pad == out_features else out[:, :out_features]


def reference_forward(x, weight, label, *, s=30.0, m=0.3,
                      easy_margin=False, ls_eps=0.0, emulate_bf16=False):
    """Plain-JAX reference of the PyTorch forward.

    emulate_bf16=True reproduces the kernel's bf16 MXU operands (normalized x
    and normalized weight rounded to bf16) for a tight numerical check.
    """
    xf = x.astype(jnp.float32)
    wf = weight.astype(jnp.float32)
    xn = xf / jnp.maximum(jnp.linalg.norm(xf, axis=1, keepdims=True), 1e-12)
    wn = wf * jax.lax.rsqrt(
        jnp.maximum(jnp.sum(wf * wf, axis=1, keepdims=True), 1e-24))
    if emulate_bf16:
        xn = xn.astype(jnp.bfloat16).astype(jnp.float32)
        wn = wn.astype(jnp.bfloat16).astype(jnp.float32)

    cosine = xn @ wn.T
    sine = jnp.sqrt(jnp.maximum(1.0 - cosine ** 2, 0.0))
    phi = cosine * math.cos(m) - sine * math.sin(m)
    if easy_margin:
        phi = jnp.where(cosine > 0, phi, cosine)
    else:
        phi = jnp.where(cosine > math.cos(math.pi - m),
                        phi, cosine - math.sin(math.pi - m) * m)
    one_hot = jax.nn.one_hot(label, weight.shape[0], dtype=cosine.dtype)
    if ls_eps > 0:
        one_hot = (1 - ls_eps) * one_hot + ls_eps / weight.shape[0]
    return (one_hot * phi + (1.0 - one_hot) * cosine) * s


if __name__ == "__main__":
    key = jax.random.PRNGKey(0)
    k_x, k_w, k_l = jax.random.split(key, 3)

    B, in_features, out_features = 8, 64, 512

    x = jax.random.normal(k_x, (B, in_features), dtype=jnp.float32)
    label = jax.random.randint(k_l, (B,), 0, out_features, dtype=jnp.int32)

    # xavier_uniform_ init for weight (out_features, in_features)
    bound = math.sqrt(6.0 / (in_features + out_features))
    weight = jax.random.uniform(
        k_w, (out_features, in_features), dtype=jnp.float32,
        minval=-bound, maxval=bound)

    # One-time prep (would be cached on the module in a real deployment):
    # f32 normalization -> bf16 -> D pad to 128 -> N pad to the class tile.
    prepared = prepare_arcface_weight(weight, batch_hint=B)
    w_prepped, block_n, d_pad, n_real = prepared
    assert n_real == out_features
    assert w_prepped.shape[0] % block_n == 0 and w_prepped.shape[1] == d_pad

    for kwargs in ({"easy_margin": False, "ls_eps": 0.0},
                   {"easy_margin": True, "ls_eps": 0.1}):
        out = arcface_forward(x, prepared, label, s=30.0, m=0.3, **kwargs)
        out = jax.block_until_ready(out)
        assert out.shape == (B, out_features)

        # Tight check against a reference that mirrors the kernel's bf16 MXU operands.
        ref_emu = reference_forward(x, weight, label, s=30.0, m=0.3,
                                    emulate_bf16=True, **kwargs)
        assert jnp.allclose(out, ref_emu, atol=2e-3, rtol=2e-3), \
            "mismatch vs bf16-emulating reference"

        # Loose check against the exact f32 PyTorch-equivalent forward
        # (difference is only bf16 operand rounding on the MXU, scaled by s=30).
        ref_f32 = reference_forward(x, weight, label, s=30.0, m=0.3,
                                    emulate_bf16=False, **kwargs)
        assert jnp.allclose(out, ref_f32, atol=0.3, rtol=0.0), \
            "drifted from f32 reference"

    print("KERNEL_OK")
</pallas_src>

<mosaic_0001>
module attributes {stable_mosaic.version = 11 : i64} {
  func.func @arcface_kernel(%arg0: i32, %arg1: memref<8x128xbf16, #tpu.memory_space<vmem>>, %arg2: memref<256x128xbf16, #tpu.memory_space<vmem>>, %arg3: memref<8x1xi32, #tpu.memory_space<vmem>>, %arg4: memref<8x256xf32, #tpu.memory_space<vmem>>) attributes {dimension_semantics = [#tpu.dimension_semantics<parallel>], iteration_bounds = array<i64: 2>, scalar_prefetch = 0 : i64, scratch_operands = 0 : i64, tpu.core_type = #tpu.core_type<tc>, window_params = [{pipeline_mode = #tpu.pipeline_mode<synchronous>, transform_indices = @transform_0, window_bounds = array<i64: 8, 128>}, {transform_indices = @transform_1, window_bounds = array<i64: 256, 128>}, {pipeline_mode = #tpu.pipeline_mode<synchronous>, transform_indices = @transform_2, window_bounds = array<i64: 8, 1>}, {transform_indices = @transform_3, window_bounds = array<i64: 8, 256>}]} {
    %c0 = arith.constant 0 : index
    %c0_0 = arith.constant 0 : index
    %0 = vector.load %arg1[%c0, %c0_0] : memref<8x128xbf16, #tpu.memory_space<vmem>>, vector<8x128xbf16>
    %c0_1 = arith.constant 0 : index
    %c0_2 = arith.constant 0 : index
    %1 = vector.load %arg2[%c0_1, %c0_2] : memref<256x128xbf16, #tpu.memory_space<vmem>>, vector<256x128xbf16>
    %cst = arith.constant dense<0.000000e+00> : vector<8x256xf32>
    %2 = tpu.matmul %0, %1, %cst {dimension_numbers = #tpu.dot_dimension_numbers<[1], [1], [0], [0], [0, 0, 1, 0], [], []>} : vector<8x128xbf16>, vector<256x128xbf16>, vector<8x256xf32> -> vector<8x256xf32>
    %3 = arith.mulf %2, %2 : vector<8x256xf32>
    %cst_3 = arith.constant 1.000000e+00 : f32
    %4 = vector.broadcast %cst_3 : f32 to vector<8x256xf32>
    %5 = arith.subf %4, %3 : vector<8x256xf32>
    %cst_4 = arith.constant 0.000000e+00 : f32
    %6 = vector.broadcast %cst_4 : f32 to vector<8x256xf32>
    %7 = arith.maximumf %5, %6 : vector<8x256xf32>
    %8 = math.sqrt %7 : vector<8x256xf32>
    %cst_5 = arith.constant 0.955336511 : f32
    %9 = vector.broadcast %cst_5 : f32 to vector<8x256xf32>
    %10 = arith.mulf %2, %9 : vector<8x256xf32>
    %cst_6 = arith.constant 0.295520216 : f32
    %11 = vector.broadcast %cst_6 : f32 to vector<8x256xf32>
    %12 = arith.mulf %8, %11 : vector<8x256xf32>
    %13 = arith.subf %10, %12 : vector<8x256xf32>
    %cst_7 = arith.constant -0.955336511 : f32
    %14 = vector.broadcast %cst_7 : f32 to vector<8x256xf32>
    %15 = arith.cmpf ogt, %2, %14 : vector<8x256xf32>
    %cst_8 = arith.constant 0.0886560603 : f32
    %16 = vector.broadcast %cst_8 : f32 to vector<8x256xf32>
    %17 = arith.subf %2, %16 : vector<8x256xf32>
    %18 = arith.select %15, %13, %17 : vector<8x256xi1>, vector<8x256xf32>
    %c0_9 = arith.constant 0 : index
    %c0_10 = arith.constant 0 : index
    %19 = vector.load %arg3[%c0_9, %c0_10] : memref<8x1xi32, #tpu.memory_space<vmem>>, vector<8x1xi32>
    %20 = tpu.iota {dimensions = array<i32: 1>} : vector<8x256xi32>
    %c256_i32 = arith.constant 256 : i32
    %21 = arith.muli %arg0, %c256_i32 : i32
    %22 = vector.broadcast %21 : i32 to vector<8x256xi32>
    %23 = arith.addi %20, %22 : vector<8x256xi32>
    %24 = vector.broadcast %19 : vector<8x1xi32> to vector<8x256xi32>
    %25 = arith.cmpi eq, %23, %24 : vector<8x256xi32>
    %26 = arith.select %25, %18, %2 : vector<8x256xi1>, vector<8x256xf32>
    %cst_11 = arith.constant 3.000000e+01 : f32
    %27 = vector.broadcast %cst_11 : f32 to vector<8x256xf32>
    %28 = arith.mulf %26, %27 : vector<8x256xf32>
    %c0_12 = arith.constant 0 : index
    %c0_13 = arith.constant 0 : index
    %29 = vector.load %arg4[%c0_12, %c0_13] : memref<8x256xf32, #tpu.memory_space<vmem>>, vector<8x256xf32>
    tpu.vector_store %arg4[%c0_12, %c0_13], %28 {strides = array<i32>} : memref<8x256xf32, #tpu.memory_space<vmem>>, vector<8x256xf32>,
    return
  }
  func.func @transform_0(%arg0: i32) -> (i32, i32) {
    %c0_i32 = arith.constant 0 : i32
    %c0_i32_0 = arith.constant 0 : i32
    %c0_i32_1 = arith.constant 0 : i32
    return %c0_i32, %c0_i32_0 : i32, i32
  }
  func.func @transform_1(%arg0: i32) -> (i32, i32) {
    %c0_i32 = arith.constant 0 : i32
    %c0_i32_0 = arith.constant 0 : i32
    return %arg0, %c0_i32 : i32, i32
  }
  func.func @transform_2(%arg0: i32) -> (i32, i32) {
    %c0_i32 = arith.constant 0 : i32
    %c0_i32_0 = arith.constant 0 : i32
    %c0_i32_1 = arith.constant 0 : i32
    return %c0_i32, %c0_i32_0 : i32, i32
  }
  func.func @transform_3(%arg0: i32) -> (i32, i32) {
    %c0_i32 = arith.constant 0 : i32
    %c0_i32_0 = arith.constant 0 : i32
    return %c0_i32, %arg0 : i32, i32
  }
}

</mosaic_0001>

<llo_original>
// kernel: tpu_custom_call.1
$region0: #{tpu_custom_call.1}
  #allocation0 [shape = 'u32[]', space=smem, size = 0x4, offset = 0x4, fixed_abs, tag = 'smem constant byte address 0x4 - core index']
  #allocation1 [shape = 'u32[144,128]{1,0:T(1,128)}', space=vmem, size = 0x12000, scoped, tag = 'internal scratch']
  %s0 = inlined_call_operand.vmem [shape: bf16[8,128], index: 0, kind: input, shape index: {}]
  %s1 = inlined_call_operand.hbm [shape: bf16[512,128], index: 1, kind: input, shape index: {}]
  %s2 = inlined_call_operand.vmem [shape: s32[8,1], index: 2, kind: input, shape index: {}]
  %s3 = inlined_call_operand.hbm [shape: f32[8,512], index: 3, kind: output, shape index: {}]
  %s4 = sld [smem:[#allocation0]]
  $region49: #{tpu_custom_call.1} parent=0
    _
  %s6 = ssub.s32 1, %s4
  %s7 = scalar_select 0, %s6, %s4
  $region1: #{tpu_custom_call.1} parent=0
    #allocation2 [shape = 'u8[131072]{0}', space=vmem, size = 0x20000, scoped, tag = 'input window, operand 1']
    #allocation3 [shape = 's32[2]{0}', space=sflag, size = 0x8, scoped, tag = 'scoped memory for tpu_custom_call.1']
    #allocation4 [shape = 's32[2]{0}', space=sflag, size = 0x8, scoped, tag = 'scoped memory for tpu_custom_call.1']
    #allocation5 [shape = 'u8[16384]{0}', space=vmem, size = 0x4000, scoped, tag = 'output window, operand 0']
    %8 = vsyncpa [#allocation3], 0
    %s9 = scalar_lea.sflag [#allocation3], 1
    %10 = vsyncpa %s9, 0
    %11 = vsyncpa [#allocation4], 0
    %s12 = scalar_lea.sflag [#allocation4], 1
    %13 = vsyncpa %s12, 0
    loop: start=0, step=1, limit=4
    $region2: #{tpu_custom_call.1} parent=1 // loop_pre_header
      _
    $region3: #{tpu_custom_call.1} parent=1 // loop_header
      %s15 = sphi 0, %s19
      %p16 = scmp.ge.s32.totalorder %s15, 4
      %s23 = sphi 0, %s23
      %s25 = sphi 0, %s23
      %s26 = sphi 0, %s25
      %s40 = sphi 0, %s26
      %s46 = sphi 0, %s48
      %s49 = sphi 0, %s46
      %s50 = sphi 0, %s49
      %s66 = sphi 0, %s50
      %s70 = sphi 0, %s70
      %s72 = sphi 0, %s70
      %s73 = sphi 0, %s72
      %s87 = sphi 0, %s73
      %s93 = sphi 0, %s95
      %s96 = sphi 0, %s93
      %s97 = sphi 0, %s96
      %s113 = sphi 0, %s97
    $region4: #{tpu_custom_call.1} parent=1 // loop_header_branch
      %18 = sbr.rel (%p16) target = $region8
    $region5: #{tpu_custom_call.1} parent=1 // loop_body
      %s20 = ssub.s32 %s15, 1
      %s21 = ssub.s32 %s15, 2
      %s22 = sadd.s32 %s15, 1
      %s24 = sadd.s32 %s23, 1
      %p27 = scmp.eq.s32.totalorder %s15, 1
      %p28 = scmp.ne.s32.totalorder %s23, %s25
      %p29 = scmp.eq.s32.totalorder %s15, 0
      %p30 = por %p28, %p29
      %p31 = scmp.ne.s32.totalorder %s23, %s25
      %p32 = scmp.eq.s32.totalorder %s20, 1
      %p33 = por %p31, %p32
      %p34 = scmp.ne.s32.totalorder %s25, %s26
      %p35 = scmp.eq.s32.totalorder %s20, 0
      %p36 = por %p34, %p35
      %p37 = scmp.ne.s32.totalorder %s25, %s26
      %p38 = scmp.eq.s32.totalorder %s21, 1
      %p39 = por %p37, %p38
      %p41 = scmp.ne.s32.totalorder %s26, %s40
      %p42 = scmp.eq.s32.totalorder %s21, 0
      %p43 = por %p41, %p42
      %s44 = ssub.s32 %s15, %s22
      %p45 = scmp.eq.s32.totalorder %s44, 0
      %s47 = sadd.s32 %s46, 1
      %s48 = scalar_select %p45, %s46, %s47
      %p51 = pneg %p45
      %p52 = scmp.eq.s32.totalorder %s15, 1
      %p53 = por %p51, %p52
      %p54 = scmp.ne.s32.totalorder %s46, %s49
      %p55 = scmp.eq.s32.totalorder %s15, 0
      %p56 = por %p54, %p55
      %p57 = scmp.ne.s32.totalorder %s46, %s49
      %p58 = scmp.eq.s32.totalorder %s20, 1
      %p59 = por %p57, %p58
      %p60 = scmp.ne.s32.totalorder %s49, %s50
      %p61 = scmp.eq.s32.totalorder %s20, 0
      %p62 = por %p60, %p61
      %p63 = scmp.ne.s32.totalorder %s49, %s50
      %p64 = scmp.eq.s32.totalorder %s21, 1
      %p65 = por %p63, %p64
      %p67 = scmp.ne.s32.totalorder %s50, %s66
      %p68 = scmp.eq.s32.totalorder %s21, 0
      %p69 = por %p67, %p68
      %s71 = sadd.s32 %s70, 1
      %p74 = scmp.eq.s32.totalorder %s15, 1
      %p75 = scmp.ne.s32.totalorder %s70, %s72
      %p76 = scmp.eq.s32.totalorder %s15, 0
      %p77 = por %p75, %p76
      %p78 = scmp.ne.s32.totalorder %s70, %s72
      %p79 = scmp.eq.s32.totalorder %s20, 1
      %p80 = por %p78, %p79
      %p81 = scmp.ne.s32.totalorder %s72, %s73
      %p82 = scmp.eq.s32.totalorder %s20, 0
      %p83 = por %p81, %p82
      %p84 = scmp.ne.s32.totalorder %s72, %s73
      %p85 = scmp.eq.s32.totalorder %s21, 1
      %p86 = por %p84, %p85
      %p88 = scmp.ne.s32.totalorder %s73, %s87
      %p89 = scmp.eq.s32.totalorder %s21, 0
      %p90 = por %p88, %p89
      %s91 = ssub.s32 %s15, %s22
      %p92 = scmp.eq.s32.totalorder %s91, 0
      %s94 = sadd.s32 %s93, 1
      %s95 = scalar_select %p92, %s93, %s94
      %p98 = pneg %p92
      %p99 = scmp.eq.s32.totalorder %s15, 1
      %p100 = por %p98, %p99
      %p101 = scmp.ne.s32.totalorder %s93, %s96
      %p102 = scmp.eq.s32.totalorder %s15, 0
      %p103 = por %p101, %p102
      %p104 = scmp.ne.s32.totalorder %s93, %s96
      %p105 = scmp.eq.s32.totalorder %s20, 1
      %p106 = por %p104, %p105
      %p107 = scmp.ne.s32.totalorder %s96, %s97
      %p108 = scmp.eq.s32.totalorder %s20, 0
      %p109 = por %p107, %p108
      %p110 = scmp.ne.s32.totalorder %s96, %s97
      %p111 = scmp.eq.s32.totalorder %s21, 1
      %p112 = por %p110, %p111
      %p114 = scmp.ne.s32.totalorder %s97, %s113
      %p115 = scmp.eq.s32.totalorder %s21, 0
      %p116 = por %p114, %p115
      %p117 = scmp.le.s32.totalorder 1, %s15
      %p118 = scmp.lt.s32.totalorder %s15, 3
      %p119 = pnand %p117, %p118
      %p120 = pneg %p119
      // Predicated region
      $region9: #{tpu_custom_call.1} parent=5 // pred_check
        _
      $region10: #{tpu_custom_call.1} parent=5 // pred_check_branch
        %122 = sbr.rel (%p119) target = $region12
      $region11: #{tpu_custom_call.1} parent=5 // pred_region
        %s123 = ssub.s32 %s15, 1
        // Predicated region
        $region13: #{tpu_custom_call.1} parent=11 // pred_check
          %p124 = pneg %p36
        $region14: #{tpu_custom_call.1} parent=11 // pred_check_branch
          %126 = sbr.rel (%p124) target = $region16
        $region15: #{tpu_custom_call.1} parent=11 // pred_region
          _
        $region16: #{tpu_custom_call.1} parent=11 // pred_fallthru
          _
        // Predicated region
        $region17: #{tpu_custom_call.1} parent=11 // pred_check
          %p127 = pneg %p83
        $region18: #{tpu_custom_call.1} parent=11 // pred_check_branch
          %129 = sbr.rel (%p127) target = $region20
        $region19: #{tpu_custom_call.1} parent=11 // pred_region
          _
        $region20: #{tpu_custom_call.1} parent=11 // pred_fallthru
          _
      $region12: #{tpu_custom_call.1} parent=5 // pred_fallthru
        _
      %p130 = scmp.lt.s32.totalorder %s15, 2
      // Predicated region
      $region21: #{tpu_custom_call.1} parent=5 // pred_check
        %p131 = pneg %p130
      $region22: #{tpu_custom_call.1} parent=5 // pred_check_branch
        %133 = sbr.rel (%p131) target = $region24
      $region23: #{tpu_custom_call.1} parent=5 // pred_region
        // Predicated region
        $region25: #{tpu_custom_call.1} parent=23 // pred_check
          %p134 = pneg %p56
        $region26: #{tpu_custom_call.1} parent=23 // pred_check_branch
          %136 = sbr.rel (%p134) target = $region28
        $region27: #{tpu_custom_call.1} parent=23 // pred_region
          %s137 = sand.u32 %s46, 1
          %s138 = scalar_lea.sflag [#allocation3], %s137
          %s139 = sand.u32 %s46, 1
          %s140 = smul.addr %s139, 128
          %s141 = scalar_lea.vmem [#allocation2], %s140
          %s142 = smul.u32 32, %s15
          %s144 = ssub.s32 2048, 2048
          %145 = vsyncadd %s138, %s144
          %s146 = smul.addr %s142, 64
          %s147 = scalar_lea.hbm %s1, %s146
          %s148 = sshll.u32 %s141, 4
          %s149 = int_to_ptr.vmem [resolvable:$true] %s148
          %154 = dma.hbm_to_vmem [thread:$0]  %s147, 2048, %s149, %s138, 64, 64, 4
        $region28: #{tpu_custom_call.1} parent=23 // pred_fallthru
          _
      $region24: #{tpu_custom_call.1} parent=5 // pred_fallthru
        _
      %p155 = scmp.le.s32.totalorder 1, %s15
      %p156 = scmp.lt.s32.totalorder %s15, 3
      %p157 = pnand %p155, %p156
      %p158 = pneg %p157
      // Predicated region
      $region29: #{tpu_custom_call.1} parent=5 // pred_check
        _
      $region30: #{tpu_custom_call.1} parent=5 // pred_check_branch
        %160 = sbr.rel (%p157) target = $region32
      $region31: #{tpu_custom_call.1} parent=5 // pred_region
        %s161 = ssub.s32 %s15, 1
        %s162 = sand.u32 %s49, 1
        %s163 = scalar_lea.sflag [#allocation3], %s162
        %s164 = sand.u32 %s49, 1
        %s165 = smul.addr %s164, 128
        %s166 = scalar_lea.vmem [#allocation2], %s165
        // Predicated region
        $region33: #{tpu_custom_call.1} parent=31 // pred_check
          %p167 = pneg %p62
        $region34: #{tpu_custom_call.1} parent=31 // pred_check_branch
          %169 = sbr.rel (%p167) target = $region36
        $region35: #{tpu_custom_call.1} parent=31 // pred_region
          %170 = dma.done %s163, 2048
        $region36: #{tpu_custom_call.1} parent=31 // pred_fallthru
          _
        %p171 = pneg %p36
        %p172 = pneg %p33
        %s173 = sand.u32 %s49, 1
        %s174 = scalar_lea.sflag [#allocation3], %s173
        %s175 = sand.u32 %s49, 1
        %s176 = smul.addr %s175, 128
        %s177 = scalar_lea.vmem [#allocation2], %s176
        %p178 = pneg %p62
        %p179 = pneg %p59
        %p180 = pneg %p83
        %p181 = pneg %p80
        %p182 = pneg %p109
        %p183 = pneg %p106
        %s184 = sand.u32 %s96, 1
        %s185 = scalar_lea.sflag [#allocation4], %s184
        %s186 = sand.u32 %s96, 1
        %s187 = smul.addr %s186, 16
        %s188 = scalar_lea.vmem [#allocation5], %s187
        %s189 = smul.u32 32, %s20
        %s190 = smul.u32 2, %s20
        %v192 = vld [vmem:[%s0] sm:$0xf]
        %v193 = vld [vmem:[%s166] sm:$0xf]
        %v194 = vld [vmem:[%s166 + $0x4] sm:$0xf]
        %v195 = vld [vmem:[%s166 + $0x8] sm:$0xf]
        %v196 = vld [vmem:[%s166 + $0xc] sm:$0xf]
        %v197 = vld [vmem:[%s166 + $0x10] sm:$0xf]
        %v198 = vld [vmem:[%s166 + $0x14] sm:$0xf]
        %v199 = vld [vmem:[%s166 + $0x18] sm:$0xf]
        %v200 = vld [vmem:[%s166 + $0x1c] sm:$0xf]
        %v201 = vld [vmem:[%s166 + $0x20] sm:$0xf]
        %v202 = vld [vmem:[%s166 + $0x24] sm:$0xf]
        %v203 = vld [vmem:[%s166 + $0x28] sm:$0xf]
        %v204 = vld [vmem:[%s166 + $0x2c] sm:$0xf]
        %v205 = vld [vmem:[%s166 + $0x30] sm:$0xf]
        %v206 = vld [vmem:[%s166 + $0x34] sm:$0xf]
        %v207 = vld [vmem:[%s166 + $0x38] sm:$0xf]
        %v208 = vld [vmem:[%s166 + $0x3c] sm:$0xf]
        %v209 = vld [vmem:[%s166 + $0x40] sm:$0xf]
        %v210 = vld [vmem:[%s166 + $0x44] sm:$0xf]
        %v211 = vld [vmem:[%s166 + $0x48] sm:$0xf]
        %v212 = vld [vmem:[%s166 + $0x4c] sm:$0xf]
        %v213 = vld [vmem:[%s166 + $0x50] sm:$0xf]
        %v214 = vld [vmem:[%s166 + $0x54] sm:$0xf]
        %v215 = vld [vmem:[%s166 + $0x58] sm:$0xf]
        %v216 = vld [vmem:[%s166 + $0x5c] sm:$0xf]
        %v217 = vld [vmem:[%s166 + $0x60] sm:$0xf]
        %v218 = vld [vmem:[%s166 + $0x64] sm:$0xf]
        %v219 = vld [vmem:[%s166 + $0x68] sm:$0xf]
        %v220 = vld [vmem:[%s166 + $0x6c] sm:$0xf]
        %v221 = vld [vmem:[%s166 + $0x70] sm:$0xf]
        %v222 = vld [vmem:[%s166 + $0x74] sm:$0xf]
        %v223 = vld [vmem:[%s166 + $0x78] sm:$0xf]
        %v224 = vld [vmem:[%s166 + $0x7c] sm:$0xf]
        %v257 = vunpack.c.l.b16 %v193
        %v258 = vunpack.c.l.b16 %v194
        %v259 = vunpack.c.l.b16 %v195
        %v260 = vunpack.c.l.b16 %v196
        %v261 = vunpack.c.l.b16 %v197
        %v262 = vunpack.c.l.b16 %v198
        %v263 = vunpack.c.l.b16 %v199
        %v264 = vunpack.c.l.b16 %v200
        %v265 = vunpack.c.l.b16 %v201
        %v266 = vunpack.c.l.b16 %v202
        %v267 = vunpack.c.l.b16 %v203
        %v268 = vunpack.c.l.b16 %v204
        %v269 = vunpack.c.l.b16 %v205
        %v270 = vunpack.c.l.b16 %v206
        %v271 = vunpack.c.l.b16 %v207
        %v272 = vunpack.c.l.b16 %v208
        %v273 = vunpack.c.l.b16 %v209
        %v274 = vunpack.c.l.b16 %v210
        %v275 = vunpack.c.l.b16 %v211
        %v276 = vunpack.c.l.b16 %v212
        %v277 = vunpack.c.l.b16 %v213
        %v278 = vunpack.c.l.b16 %v214
        %v279 = vunpack.c.l.b16 %v215
        %v280 = vunpack.c.l.b16 %v216
        %v281 = vunpack.c.l.b16 %v217
        %v282 = vunpack.c.l.b16 %v218
        %v283 = vunpack.c.l.b16 %v219
        %v284 = vunpack.c.l.b16 %v220
        %v285 = vunpack.c.l.b16 %v221
        %v286 = vunpack.c.l.b16 %v222
        %v287 = vunpack.c.l.b16 %v223
        %v288 = vunpack.c.l.b16 %v224
        %v289 = vpack.c.b16 %v258, %v257
        %v290 = vpack.c.b16 %v260, %v259
        %v291 = vpack.c.b16 %v262, %v261
        %v292 = vpack.c.b16 %v264, %v263
        %v293 = vpack.c.b16 %v266, %v265
        %v294 = vpack.c.b16 %v268, %v267
        %v295 = vpack.c.b16 %v270, %v269
        %v296 = vpack.c.b16 %v272, %v271
        %v297 = vpack.c.b16 %v274, %v273
        %v298 = vpack.c.b16 %v276, %v275
        %v299 = vpack.c.b16 %v278, %v277
        %v300 = vpack.c.b16 %v280, %v279
        %v301 = vpack.c.b16 %v282, %v281
        %v302 = vpack.c.b16 %v284, %v283
        %v303 = vpack.c.b16 %v286, %v285
        %v304 = vpack.c.b16 %v288, %v287
        %321 = vmatprep.subr.bf16.mxu0 0
        %322 = vmatpush1.bf16.xpose.msra.mxu0 %v289
        %323 = vmatprep.subr.bf16.mxu0 0
        %324 = vmatpush1.bf16.xpose.msra.mxu0 %v290
        %325 = vmatprep.subr.bf16.mxu0 0
        %326 = vmatpush1.bf16.xpose.msra.mxu0 %v291
        %327 = vmatprep.subr.bf16.mxu0 0
        %328 = vmatpush1.bf16.xpose.msra.mxu0 %v292
        %329 = vmatprep.subr.bf16.mxu0 0
        %330 = vmatpush1.bf16.xpose.msra.mxu0 %v293
        %331 = vmatprep.subr.bf16.mxu0 0
        %332 = vmatpush1.bf16.xpose.msra.mxu0 %v294
        %333 = vmatprep.subr.bf16.mxu0 0
        %334 = vmatpush1.bf16.xpose.msra.mxu0 %v295
        %335 = vmatprep.subr.bf16.mxu0 0
        %336 = vmatpush1.bf16.xpose.msra.mxu0 %v296
        %337 = vmatprep.subr.bf16.mxu0 0
        %338 = vmatpush1.bf16.xpose.msra.mxu0 %v297
        %339 = vmatprep.subr.bf16.mxu0 0
        %340 = vmatpush1.bf16.xpose.msra.mxu0 %v298
        %341 = vmatprep.subr.bf16.mxu0 0
        %342 = vmatpush1.bf16.xpose.msra.mxu0 %v299
        %343 = vmatprep.subr.bf16.mxu0 0
        %344 = vmatpush1.bf16.xpose.msra.mxu0 %v300
        %345 = vmatprep.subr.bf16.mxu0 0
        %346 = vmatpush1.bf16.xpose.msra.mxu0 %v301
        %347 = vmatprep.subr.bf16.mxu0 0
        %348 = vmatpush1.bf16.xpose.msra.mxu0 %v302
        %349 = vmatprep.subr.bf16.mxu0 0
        %350 = vmatpush1.bf16.xpose.msra.mxu0 %v303
        %351 = vmatprep.subr.bf16.mxu0 0
        %352 = vmatpush1.bf16.xpose.msra.mxu0 %v304
        %353 = vmatprep.mubr.bf16.mxu0 0
        %354 = vmatmul.mubr.bf16.gmra.mrb[0].mxu0 %v192
        %v355 = vpop.f32.mrb[0].mxu0
        %v356 = vadd.f32 0.0, %v355
        %v357 = vpop.f32.mrb[0].mxu0
        %v358 = vadd.f32 0.0, %v357
        %v359 = vpop.f32.mrb[0].mxu0
        %v360 = vpop.f32.mrb[0].mxu0
        %361 = vdwg.mxu0
        %v362 = vmul.f32 %v356, %v356
        %v363 = vmul.f32 %v358, %v358
        %v364 = vsub.f32 1.0, %v362
        %v365 = vsub.f32 1.0, %v363
        %v366 = vmax.f32 %v364, 0.0
        %v367 = vmax.f32 %v365, 0.0
        %v368 = vrsqrt.pop %v366
        %v369 = vmul.f32 %v366, %v368
        %vm370 = vcmp.eq.f32.partialorder %v366, inf
        %v371 = vsel %vm370, %v366, %v369
        %vm372 = vcmp.eq.f32.partialorder %v366, 0.0
        %v373 = vand.u32 %v366, 2147483648
        %v374 = vsel %vm372, %v373, %v371
        %v375 = vrsqrt.pop %v367
        %v376 = vmul.f32 %v367, %v375
        %vm377 = vcmp.eq.f32.partialorder %v367, inf
        %v378 = vsel %vm377, %v367, %v376
        %vm379 = vcmp.eq.f32.partialorder %v367, 0.0
        %v380 = vand.u32 %v367, 2147483648
        %v381 = vsel %vm379, %v380, %v378
        %v382 = vmul.f32 %v356, 0.9553365
        %v383 = vmul.f32 %v358, 0.9553365
        %v384 = vmul.f32 %v374, 0.29552022
        %v385 = vmul.f32 %v381, 0.29552022
        %v386 = vsub.f32 %v382, %v384
        %v387 = vsub.f32 %v383, %v385
        %vm388 = vcmp.gt.f32.partialorder %v356, -0.9553365
        %vm389 = vcmp.gt.f32.partialorder %v358, -0.9553365
        %v390 = vsub.f32 %v356, 0.08865606
        %v391 = vsub.f32 %v358, 0.08865606
        %v392 = vsel %vm388, %v386, %v390
        %v393 = vsel %vm389, %v387, %v391
        %v394 = vld [vmem:[%s2] sm:$0xff]
        %v395 = vlaneseq
        %v396 = vand.u32 %v395, 127
        %v397 = vadd.s32 %v396, 128
        %s398 = smul.u32 %s20, 256
        %v399 = vstv %s398
        %v400 = vadd.s32 %v396, %v399
        %v401 = vadd.s32 %v397, %v399
        %402 = vset.pattern.permute.xlu0 0
        %403 = vperm.xlu0 %402, %v394
        %v404 = vpop.permute.xlu0 %403
        %vm405 = vcmp.eq.s32.totalorder %v400, %v404
        %vm406 = vcmp.eq.s32.totalorder %v401, %v404
        %v407 = vsel %vm405, %v392, %v356
        %v408 = vsel %vm406, %v393, %v358
        %v409 = vmul.f32 %v407, 30.0
        %v410 = vmul.f32 %v408, 30.0
        %411 = vst [vmem:[%s188] sm:$0xff] %v409
        %412 = vst [vmem:[%s188 + $0x8] sm:$0xff] %v410
        %s413 = sand.u32 %s96, 1
        %s414 = scalar_lea.sflag [#allocation4], %s413
        %s415 = sand.u32 %s96, 1
        %s416 = smul.addr %s415, 16
        %s417 = scalar_lea.vmem [#allocation5], %s416
        // Predicated region
        $region37: #{tpu_custom_call.1} parent=31 // pred_check
          %p418 = pneg %p106
        $region38: #{tpu_custom_call.1} parent=31 // pred_check_branch
          %420 = sbr.rel (%p418) target = $region40
        $region39: #{tpu_custom_call.1} parent=31 // pred_region
          %s421 = smul.u32 2, %s20
          %s423 = ssub.s32 256, 256
          %424 = vsyncadd %s414, %s423
          %s425 = smul.addr %s421, 128
          %s426 = scalar_lea.hbm %s3, %s425
          %s428 = sshll.u32 %s417, 4
          %s429 = int_to_ptr.vmem [resolvable:$true] %s428
          %431 = dma.vmem_to_hbm [thread:$0]  %s429, 256, %s426, %s414
        $region40: #{tpu_custom_call.1} parent=31 // pred_fallthru
          _
      $region32: #{tpu_custom_call.1} parent=5 // pred_fallthru
        _
      %p432 = scmp.le.s32.totalorder 2, %s15
      // Predicated region
      $region41: #{tpu_custom_call.1} parent=5 // pred_check
        %p433 = pneg %p432
      $region42: #{tpu_custom_call.1} parent=5 // pred_check_branch
        %435 = sbr.rel (%p433) target = $region44
      $region43: #{tpu_custom_call.1} parent=5 // pred_region
        %s436 = ssub.s32 %s15, 2
        // Predicated region
        $region45: #{tpu_custom_call.1} parent=43 // pred_check
          %p437 = pneg %p112
        $region46: #{tpu_custom_call.1} parent=43 // pred_check_branch
          %439 = sbr.rel (%p437) target = $region48
        $region47: #{tpu_custom_call.1} parent=43 // pred_region
          %s440 = sand.u32 %s97, 1
          %s441 = scalar_lea.sflag [#allocation4], %s440
          %s442 = sand.u32 %s97, 1
          %s443 = smul.addr %s442, 16
          %s444 = scalar_lea.vmem [#allocation5], %s443
          %445 = dma.done %s441, 256
        $region48: #{tpu_custom_call.1} parent=43 // pred_fallthru
          _
      $region44: #{tpu_custom_call.1} parent=5 // pred_fallthru
        _
    $region6: #{tpu_custom_call.1} parent=1 // loop_footer
      %s19 = sadd.s32 1, %s15
    $region7: #{tpu_custom_call.1} parent=1 // loop_footer_branch
      %14 = sbr.rel target = $region3
    $region8: #{tpu_custom_call.1} parent=1 // loop_exit
      _
    %446 = vsyncpa [#allocation3], 1
    %s447 = scalar_lea.sflag [#allocation3], 1
    %448 = vsyncpa %s447, 1
    %449 = vsyncpa [#allocation4], 1
    %s450 = scalar_lea.sflag [#allocation4], 1
    %451 = vsyncpa %s450, 1

</llo_original>
